<compile_context>
chip_gen: v5e
topology: v5e:2x2
jax: 0.10.0
libtpu: 0.0.40
codegen_flags: <defaults>
</compile_context>

<pallas_src>
import jax
import jax.numpy as jnp
import numpy as np
from jax import lax
from jax.experimental import pallas as pl
from jax.experimental.pallas import tpu as pltpu

# ----------------------------- problem sizes --------------------------------
B, C_IN, H, W = 2, 4, 16, 16      # input (NCHW): (2, 4, 16, 16)
C_OUT, K = 8, 3                   # Conv2d(4, 8, kernel_size=3, padding=1)
HW = H * W                        # 256 spatial positions
ROWS = B * HW                     # 512 im2col rows
K_RAW = K * K * C_IN              # 36  real contraction dim
K_DIM = K_RAW + 1                 # 37  (+1 ones column carrying the bias)


# ------------------------------ Pallas kernel -------------------------------
def conv_relu_kernel(x_ref, w_ref, o_ref):
    """x_ref : (ROWS, K_DIM)   im2col patches + trailing ones column
       w_ref : (K_DIM, C_OUT)  flattened conv weights (kh, kw, cin) + bias row
       o_ref : (ROWS, C_OUT)   relu(x @ w)  (bias folded into the matmul)."""
    acc = jnp.dot(x_ref[...], w_ref[...], preferred_element_type=jnp.float32)
    o_ref[...] = jnp.maximum(acc, 0.0)


@jax.jit
def feature_extractor(x_nchw, w_hwio, bias):
    """x_nchw: (B, C_IN, H, W) f32 -> (B, H*W, C_OUT) f32 (PyTorch semantics)."""
    # NCHW -> NHWC, zero-pad spatial dims (padding=1).
    x_nhwc = jnp.transpose(x_nchw, (0, 2, 3, 1))
    x_pad = jnp.pad(x_nhwc, ((0, 0), (1, 1), (1, 1), (0, 0)))

    # Wrapper-side im2col (fused by XLA under jit): (ROWS, K*K*C_IN) with
    # (kh, kw, cin) ordering, matching w_hwio.reshape(K*K*C_IN, C_OUT).
    # Row index = b*HW + h*W + w, identical to view(B,C,-1).permute(0,2,1).
    patches = [x_pad[:, kh:kh + H, kw:kw + W, :]
               for kh in range(K) for kw in range(K)]
    x_col = jnp.concatenate(patches, axis=-1).reshape(ROWS, K_RAW)

    # Fold the bias into the matmul: ones column in LHS, bias row in weights.
    x_col = jnp.concatenate(
        [x_col, jnp.ones((ROWS, 1), jnp.float32)], axis=-1)          # (ROWS, 37)
    w_mat = jnp.concatenate(
        [w_hwio.reshape(K_RAW, C_OUT), bias.reshape(1, C_OUT)], axis=0)  # (37, C_OUT)

    # Single grid step on all generations: the body (~0.5 MFLOP, ~90 KiB of
    # operands) is far smaller than per-grid-step pipeline overhead, so no
    # batch split / multi-core sharding at this size.
    out2d = pl.pallas_call(
        conv_relu_kernel,
        out_shape=jax.ShapeDtypeStruct((ROWS, C_OUT), jnp.float32),
        grid=(1,),
        in_specs=[
            pl.BlockSpec((ROWS, K_DIM), lambda i: (0, 0)),
            pl.BlockSpec((K_DIM, C_OUT), lambda i: (0, 0)),
        ],
        out_specs=pl.BlockSpec((ROWS, C_OUT), lambda i: (0, 0)),
        compiler_params=pltpu.CompilerParams(
            dimension_semantics=("arbitrary",)),
    )(x_col, w_mat)

    # Row-major, metadata-only reshape back to (B, H*W, C_OUT).
    return out2d.reshape(B, HW, C_OUT)


# --------------------------- plain-JAX reference -----------------------------
def feature_extractor_ref(x_nchw, w_hwio, bias):
    w_oihw = jnp.transpose(w_hwio, (3, 2, 0, 1))          # HWIO -> OIHW
    y = lax.conv_general_dilated(
        x_nchw, w_oihw, window_strides=(1, 1), padding="SAME",
        dimension_numbers=("NCHW", "OIHW", "NCHW"))
    y = y + bias.reshape(1, C_OUT, 1, 1)
    y = jnp.maximum(y, 0.0)
    # view(B, C, -1).permute(0, 2, 1)
    return jnp.transpose(y.reshape(B, C_OUT, HW), (0, 2, 1))


# ---------------------------------- main -------------------------------------
if __name__ == "__main__":
    # Deterministic parameters (synthetic, no checkpoint loading).
    kw_key, kb_key = jax.random.split(jax.random.PRNGKey(42))
    w_hwio = jax.random.normal(kw_key, (K, K, C_IN, C_OUT), jnp.float32) * 0.1
    bias = jax.random.normal(kb_key, (C_OUT,), jnp.float32) * 0.1

    # Deterministic example input (NCHW, as PyTorch would feed it).
    x = jax.random.normal(jax.random.PRNGKey(0), (B, C_IN, H, W), jnp.float32)

    out = feature_extractor(x, w_hwio, bias)
    out = jax.block_until_ready(out)

    ref = jax.block_until_ready(feature_extractor_ref(x, w_hwio, bias))
    assert out.shape == (B, HW, C_OUT)
    np.testing.assert_allclose(np.asarray(out), np.asarray(ref),
                               rtol=1e-5, atol=1e-5)
    print("KERNEL_OK")
</pallas_src>

<mosaic_0001>
module attributes {stable_mosaic.version = 11 : i64} {
  func.func @conv_relu_kernel(%arg0: i32, %arg1: memref<512x37xf32, #tpu.memory_space<vmem>>, %arg2: memref<37x8xf32, #tpu.memory_space<vmem>>, %arg3: memref<512x8xf32, #tpu.memory_space<vmem>>) attributes {dimension_semantics = [#tpu.dimension_semantics<arbitrary>], iteration_bounds = array<i64: 1>, scalar_prefetch = 0 : i64, scratch_operands = 0 : i64, tpu.core_type = #tpu.core_type<tc>, window_params = [{pipeline_mode = #tpu.pipeline_mode<synchronous>, transform_indices = @transform_0, window_bounds = array<i64: 512, 37>}, {pipeline_mode = #tpu.pipeline_mode<synchronous>, transform_indices = @transform_1, window_bounds = array<i64: 37, 8>}, {pipeline_mode = #tpu.pipeline_mode<synchronous>, transform_indices = @transform_2, window_bounds = array<i64: 512, 8>}]} {
    %c0 = arith.constant 0 : index
    %c0_0 = arith.constant 0 : index
    %0 = vector.load %arg1[%c0, %c0_0] : memref<512x37xf32, #tpu.memory_space<vmem>>, vector<512x37xf32>
    %c0_1 = arith.constant 0 : index
    %c0_2 = arith.constant 0 : index
    %1 = vector.load %arg2[%c0_1, %c0_2] : memref<37x8xf32, #tpu.memory_space<vmem>>, vector<37x8xf32>
    %cst = arith.constant dense<0.000000e+00> : vector<512x8xf32>
    %2 = tpu.matmul %0, %1, %cst {dimension_numbers = #tpu.dot_dimension_numbers<[1], [0], [0], [1], [0, 0, 1, 1], [], []>} : vector<512x37xf32>, vector<37x8xf32>, vector<512x8xf32> -> vector<512x8xf32>
    %cst_3 = arith.constant 0.000000e+00 : f32
    %3 = vector.broadcast %cst_3 : f32 to vector<512x8xf32>
    %4 = arith.maximumf %2, %3 : vector<512x8xf32>
    %c0_4 = arith.constant 0 : index
    %c0_5 = arith.constant 0 : index
    %5 = vector.load %arg3[%c0_4, %c0_5] : memref<512x8xf32, #tpu.memory_space<vmem>>, vector<512x8xf32>
    tpu.vector_store %arg3[%c0_4, %c0_5], %4 {strides = array<i32>} : memref<512x8xf32, #tpu.memory_space<vmem>>, vector<512x8xf32>,
    return
  }
  func.func @transform_0(%arg0: i32) -> (i32, i32) {
    %c0_i32 = arith.constant 0 : i32
    %c0_i32_0 = arith.constant 0 : i32
    %c0_i32_1 = arith.constant 0 : i32
    return %c0_i32, %c0_i32_0 : i32, i32
  }
  func.func @transform_1(%arg0: i32) -> (i32, i32) {
    %c0_i32 = arith.constant 0 : i32
    %c0_i32_0 = arith.constant 0 : i32
    %c0_i32_1 = arith.constant 0 : i32
    return %c0_i32, %c0_i32_0 : i32, i32
  }
  func.func @transform_2(%arg0: i32) -> (i32, i32) {
    %c0_i32 = arith.constant 0 : i32
    %c0_i32_0 = arith.constant 0 : i32
    %c0_i32_1 = arith.constant 0 : i32
    return %c0_i32, %c0_i32_0 : i32, i32
  }
}

</mosaic_0001>

<llo_original>
// kernel: feature_extractor.1
$region0: #{feature_extractor.1}
  #allocation0 [shape = 'u32[]', space=smem, size = 0x4, offset = 0x4, fixed_abs, tag = 'smem constant byte address 0x4 - core index']
  #allocation1 [shape = 'u32[72,128]{1,0:T(1,128)}', space=vmem, size = 0x9000, scoped, tag = 'internal scratch']
  %s0 = inlined_call_operand.vmem [shape: f32[512,37], index: 0, kind: input, shape index: {}]
  %s1 = inlined_call_operand.vmem [shape: f32[37,8], index: 1, kind: input, shape index: {}]
  %s2 = inlined_call_operand.vmem [shape: f32[512,8], index: 2, kind: output, shape index: {}]
  %s3 = sld [smem:[#allocation0]]
  $region18: #{feature_extractor.1} parent=0
    _
  %s5 = ssub.s32 1, %s3
  %s6 = scalar_select 0, %s5, %s3
  // Predicated region
  $region2: #{feature_extractor.1} parent=0 // pred_check
    _
  $region3: #{feature_extractor.1} parent=0 // pred_check_branch
    %8 = sbr.rel (0) target = $region5
  $region4: #{feature_extractor.1} parent=0 // pred_region
    _
  $region5: #{feature_extractor.1} parent=0 // pred_fallthru
    _
  // Predicated region
  $region6: #{feature_extractor.1} parent=0 // pred_check
    _
  $region7: #{feature_extractor.1} parent=0 // pred_check_branch
    %10 = sbr.rel (0) target = $region9
  $region8: #{feature_extractor.1} parent=0 // pred_region
    _
  $region9: #{feature_extractor.1} parent=0 // pred_fallthru
    _
  %v11 = vld [vmem:[%s0] sm:$0xff]
  %v12 = vld [vmem:[%s0 + $0x8] sm:$0xff]
  %v13 = vld [vmem:[%s0 + $0x10] sm:$0xff]
  %v14 = vld [vmem:[%s0 + $0x18] sm:$0xff]
  %v15 = vld [vmem:[%s0 + $0x20] sm:$0xff]
  %v16 = vld [vmem:[%s0 + $0x28] sm:$0xff]
  %v17 = vld [vmem:[%s0 + $0x30] sm:$0xff]
  %v18 = vld [vmem:[%s0 + $0x38] sm:$0xff]
  %v19 = vld [vmem:[%s0 + $0x40] sm:$0xff]
  %v20 = vld [vmem:[%s0 + $0x48] sm:$0xff]
  %v21 = vld [vmem:[%s0 + $0x50] sm:$0xff]
  %v22 = vld [vmem:[%s0 + $0x58] sm:$0xff]
  %v23 = vld [vmem:[%s0 + $0x60] sm:$0xff]
  %v24 = vld [vmem:[%s0 + $0x68] sm:$0xff]
  %v25 = vld [vmem:[%s0 + $0x70] sm:$0xff]
  %v26 = vld [vmem:[%s0 + $0x78] sm:$0xff]
  %v27 = vld [vmem:[%s0 + $0x80] sm:$0xff]
  %v28 = vld [vmem:[%s0 + $0x88] sm:$0xff]
  %v29 = vld [vmem:[%s0 + $0x90] sm:$0xff]
  %v30 = vld [vmem:[%s0 + $0x98] sm:$0xff]
  %v31 = vld [vmem:[%s0 + $0xa0] sm:$0xff]
  %v32 = vld [vmem:[%s0 + $0xa8] sm:$0xff]
  %v33 = vld [vmem:[%s0 + $0xb0] sm:$0xff]
  %v34 = vld [vmem:[%s0 + $0xb8] sm:$0xff]
  %v35 = vld [vmem:[%s0 + $0xc0] sm:$0xff]
  %v36 = vld [vmem:[%s0 + $0xc8] sm:$0xff]
  %v37 = vld [vmem:[%s0 + $0xd0] sm:$0xff]
  %v38 = vld [vmem:[%s0 + $0xd8] sm:$0xff]
  %v39 = vld [vmem:[%s0 + $0xe0] sm:$0xff]
  %v40 = vld [vmem:[%s0 + $0xe8] sm:$0xff]
  %v41 = vld [vmem:[%s0 + $0xf0] sm:$0xff]
  %v42 = vld [vmem:[%s0 + $0xf8] sm:$0xff]
  %v43 = vld [vmem:[%s0 + $0x100] sm:$0xff]
  %v44 = vld [vmem:[%s0 + $0x108] sm:$0xff]
  %v45 = vld [vmem:[%s0 + $0x110] sm:$0xff]
  %v46 = vld [vmem:[%s0 + $0x118] sm:$0xff]
  %v47 = vld [vmem:[%s0 + $0x120] sm:$0xff]
  %v48 = vld [vmem:[%s0 + $0x128] sm:$0xff]
  %v49 = vld [vmem:[%s0 + $0x130] sm:$0xff]
  %v50 = vld [vmem:[%s0 + $0x138] sm:$0xff]
  %v51 = vld [vmem:[%s0 + $0x140] sm:$0xff]
  %v52 = vld [vmem:[%s0 + $0x148] sm:$0xff]
  %v53 = vld [vmem:[%s0 + $0x150] sm:$0xff]
  %v54 = vld [vmem:[%s0 + $0x158] sm:$0xff]
  %v55 = vld [vmem:[%s0 + $0x160] sm:$0xff]
  %v56 = vld [vmem:[%s0 + $0x168] sm:$0xff]
  %v57 = vld [vmem:[%s0 + $0x170] sm:$0xff]
  %v58 = vld [vmem:[%s0 + $0x178] sm:$0xff]
  %v59 = vld [vmem:[%s0 + $0x180] sm:$0xff]
  %v60 = vld [vmem:[%s0 + $0x188] sm:$0xff]
  %v61 = vld [vmem:[%s0 + $0x190] sm:$0xff]
  %v62 = vld [vmem:[%s0 + $0x198] sm:$0xff]
  %v63 = vld [vmem:[%s0 + $0x1a0] sm:$0xff]
  %v64 = vld [vmem:[%s0 + $0x1a8] sm:$0xff]
  %v65 = vld [vmem:[%s0 + $0x1b0] sm:$0xff]
  %v66 = vld [vmem:[%s0 + $0x1b8] sm:$0xff]
  %v67 = vld [vmem:[%s0 + $0x1c0] sm:$0xff]
  %v68 = vld [vmem:[%s0 + $0x1c8] sm:$0xff]
  %v69 = vld [vmem:[%s0 + $0x1d0] sm:$0xff]
  %v70 = vld [vmem:[%s0 + $0x1d8] sm:$0xff]
  %v71 = vld [vmem:[%s0 + $0x1e0] sm:$0xff]
  %v72 = vld [vmem:[%s0 + $0x1e8] sm:$0xff]
  %v73 = vld [vmem:[%s0 + $0x1f0] sm:$0xff]
  %v74 = vld [vmem:[%s0 + $0x1f8] sm:$0xff]
  %v75 = vld [vmem:[%s1] sm:$0xff]
  %v76 = vld [vmem:[%s1 + $0x8] sm:$0xff]
  %v77 = vld [vmem:[%s1 + $0x10] sm:$0xff]
  %v78 = vld [vmem:[%s1 + $0x18] sm:$0xff]
  %v79 = vld [vmem:[%s1 + $0x20] sm:$0x1f]
  %vm80 = vcmask 302080
  %v82 = vsel %vm80, %v11, 0
  %v85 = vsel %vm80, %v12, 0
  %v88 = vsel %vm80, %v13, 0
  %v91 = vsel %vm80, %v14, 0
  %v94 = vsel %vm80, %v15, 0
  %v97 = vsel %vm80, %v16, 0
  %v100 = vsel %vm80, %v17, 0
  %v103 = vsel %vm80, %v18, 0
  %v106 = vsel %vm80, %v19, 0
  %v109 = vsel %vm80, %v20, 0
  %v112 = vsel %vm80, %v21, 0
  %v115 = vsel %vm80, %v22, 0
  %v118 = vsel %vm80, %v23, 0
  %v121 = vsel %vm80, %v24, 0
  %v124 = vsel %vm80, %v25, 0
  %v127 = vsel %vm80, %v26, 0
  %v130 = vsel %vm80, %v27, 0
  %v133 = vsel %vm80, %v28, 0
  %v136 = vsel %vm80, %v29, 0
  %v139 = vsel %vm80, %v30, 0
  %v142 = vsel %vm80, %v31, 0
  %v145 = vsel %vm80, %v32, 0
  %v148 = vsel %vm80, %v33, 0
  %v151 = vsel %vm80, %v34, 0
  %v154 = vsel %vm80, %v35, 0
  %v157 = vsel %vm80, %v36, 0
  %v160 = vsel %vm80, %v37, 0
  %v163 = vsel %vm80, %v38, 0
  %v166 = vsel %vm80, %v39, 0
  %v169 = vsel %vm80, %v40, 0
  %v172 = vsel %vm80, %v41, 0
  %v175 = vsel %vm80, %v42, 0
  %v178 = vsel %vm80, %v43, 0
  %v181 = vsel %vm80, %v44, 0
  %v184 = vsel %vm80, %v45, 0
  %v187 = vsel %vm80, %v46, 0
  %v190 = vsel %vm80, %v47, 0
  %v193 = vsel %vm80, %v48, 0
  %v196 = vsel %vm80, %v49, 0
  %v199 = vsel %vm80, %v50, 0
  %v202 = vsel %vm80, %v51, 0
  %v205 = vsel %vm80, %v52, 0
  %v208 = vsel %vm80, %v53, 0
  %v211 = vsel %vm80, %v54, 0
  %v214 = vsel %vm80, %v55, 0
  %v217 = vsel %vm80, %v56, 0
  %v220 = vsel %vm80, %v57, 0
  %v223 = vsel %vm80, %v58, 0
  %v226 = vsel %vm80, %v59, 0
  %v229 = vsel %vm80, %v60, 0
  %v232 = vsel %vm80, %v61, 0
  %v235 = vsel %vm80, %v62, 0
  %v238 = vsel %vm80, %v63, 0
  %v241 = vsel %vm80, %v64, 0
  %v244 = vsel %vm80, %v65, 0
  %v247 = vsel %vm80, %v66, 0
  %v250 = vsel %vm80, %v67, 0
  %v253 = vsel %vm80, %v68, 0
  %v256 = vsel %vm80, %v69, 0
  %v259 = vsel %vm80, %v70, 0
  %v262 = vsel %vm80, %v71, 0
  %v265 = vsel %vm80, %v72, 0
  %v268 = vsel %vm80, %v73, 0
  %v271 = vsel %vm80, %v74, 0
  %vm273 = vcmask 1044480
  %v275 = vsel %vm273, %v79, 0
  %277 = vmatpush.msra.mxu0 0.0
  %278 = vmatpush.msra.mxu0 0.0
  %279 = vmatpush.msra.mxu0 0.0
  %280 = vmatpush.msra.mxu0 0.0
  %281 = vmatpush.msra.mxu0 0.0
  %282 = vmatpush.msra.mxu0 0.0
  %283 = vmatpush.msra.mxu0 0.0
  %284 = vmatpush.msra.mxu0 0.0
  %285 = vmatpush.msra.mxu0 0.0
  %286 = vmatpush.msra.mxu0 0.0
  %287 = vmatpush.msra.mxu0 0.0
  %288 = vmatpush.msra.mxu0 %v275
  %289 = vmatpush.msra.mxu0 %v78
  %290 = vmatpush.msra.mxu0 %v77
  %291 = vmatpush.msra.mxu0 %v76
  %292 = vmatpush.msra.mxu0 %v75
  %293 = vmatmul.f32.gmra.mxu0 %v82
  %v294 = vpop.f32.mrf.mxu0
  %v295 = vadd.f32 0.0, %v294
  %296 = vmatmul.f32.gmra.mxu0 %v85
  %v297 = vpop.f32.mrf.mxu0
  %v298 = vadd.f32 0.0, %v297
  %299 = vmatmul.f32.gmra.mxu0 %v88
  %v300 = vpop.f32.mrf.mxu0
  %v301 = vadd.f32 0.0, %v300
  %302 = vmatmul.f32.gmra.mxu0 %v91
  %v303 = vpop.f32.mrf.mxu0
  %v304 = vadd.f32 0.0, %v303
  %305 = vmatmul.f32.gmra.mxu0 %v94
  %v306 = vpop.f32.mrf.mxu0
  %v307 = vadd.f32 0.0, %v306
  %308 = vmatmul.f32.gmra.mxu0 %v97
  %v309 = vpop.f32.mrf.mxu0
  %v310 = vadd.f32 0.0, %v309
  %311 = vmatmul.f32.gmra.mxu0 %v100
  %v312 = vpop.f32.mrf.mxu0
  %v313 = vadd.f32 0.0, %v312
  %314 = vmatmul.f32.gmra.mxu0 %v103
  %v315 = vpop.f32.mrf.mxu0
  %v316 = vadd.f32 0.0, %v315
  %317 = vmatmul.f32.gmra.mxu0 %v106
  %v318 = vpop.f32.mrf.mxu0
  %v319 = vadd.f32 0.0, %v318
  %320 = vmatmul.f32.gmra.mxu0 %v109
  %v321 = vpop.f32.mrf.mxu0
  %v322 = vadd.f32 0.0, %v321
  %323 = vmatmul.f32.gmra.mxu0 %v112
  %v324 = vpop.f32.mrf.mxu0
  %v325 = vadd.f32 0.0, %v324
  %326 = vmatmul.f32.gmra.mxu0 %v115
  %v327 = vpop.f32.mrf.mxu0
  %v328 = vadd.f32 0.0, %v327
  %329 = vmatmul.f32.gmra.mxu0 %v118
  %v330 = vpop.f32.mrf.mxu0
  %v331 = vadd.f32 0.0, %v330
  %332 = vmatmul.f32.gmra.mxu0 %v121
  %v333 = vpop.f32.mrf.mxu0
  %v334 = vadd.f32 0.0, %v333
  %335 = vmatmul.f32.gmra.mxu0 %v124
  %v336 = vpop.f32.mrf.mxu0
  %v337 = vadd.f32 0.0, %v336
  %338 = vmatmul.f32.gmra.mxu0 %v127
  %v339 = vpop.f32.mrf.mxu0
  %v340 = vadd.f32 0.0, %v339
  %341 = vmatmul.f32.gmra.mxu0 %v130
  %v342 = vpop.f32.mrf.mxu0
  %v343 = vadd.f32 0.0, %v342
  %344 = vmatmul.f32.gmra.mxu0 %v133
  %v345 = vpop.f32.mrf.mxu0
  %v346 = vadd.f32 0.0, %v345
  %347 = vmatmul.f32.gmra.mxu0 %v136
  %v348 = vpop.f32.mrf.mxu0
  %v349 = vadd.f32 0.0, %v348
  %350 = vmatmul.f32.gmra.mxu0 %v139
  %v351 = vpop.f32.mrf.mxu0
  %v352 = vadd.f32 0.0, %v351
  %353 = vmatmul.f32.gmra.mxu0 %v142
  %v354 = vpop.f32.mrf.mxu0
  %v355 = vadd.f32 0.0, %v354
  %356 = vmatmul.f32.gmra.mxu0 %v145
  %v357 = vpop.f32.mrf.mxu0
  %v358 = vadd.f32 0.0, %v357
  %359 = vmatmul.f32.gmra.mxu0 %v148
  %v360 = vpop.f32.mrf.mxu0
  %v361 = vadd.f32 0.0, %v360
  %362 = vmatmul.f32.gmra.mxu0 %v151
  %v363 = vpop.f32.mrf.mxu0
  %v364 = vadd.f32 0.0, %v363
  %365 = vmatmul.f32.gmra.mxu0 %v154
  %v366 = vpop.f32.mrf.mxu0
  %v367 = vadd.f32 0.0, %v366
  %368 = vmatmul.f32.gmra.mxu0 %v157
  %v369 = vpop.f32.mrf.mxu0
  %v370 = vadd.f32 0.0, %v369
  %371 = vmatmul.f32.gmra.mxu0 %v160
  %v372 = vpop.f32.mrf.mxu0
  %v373 = vadd.f32 0.0, %v372
  %374 = vmatmul.f32.gmra.mxu0 %v163
  %v375 = vpop.f32.mrf.mxu0
  %v376 = vadd.f32 0.0, %v375
  %377 = vmatmul.f32.gmra.mxu0 %v166
  %v378 = vpop.f32.mrf.mxu0
  %v379 = vadd.f32 0.0, %v378
  %380 = vmatmul.f32.gmra.mxu0 %v169
  %v381 = vpop.f32.mrf.mxu0
  %v382 = vadd.f32 0.0, %v381
  %383 = vmatmul.f32.gmra.mxu0 %v172
  %v384 = vpop.f32.mrf.mxu0
  %v385 = vadd.f32 0.0, %v384
  %386 = vmatmul.f32.gmra.mxu0 %v175
  %v387 = vpop.f32.mrf.mxu0
  %v388 = vadd.f32 0.0, %v387
  %389 = vmatmul.f32.gmra.mxu0 %v178
  %v390 = vpop.f32.mrf.mxu0
  %v391 = vadd.f32 0.0, %v390
  %392 = vmatmul.f32.gmra.mxu0 %v181
  %v393 = vpop.f32.mrf.mxu0
  %v394 = vadd.f32 0.0, %v393
  %395 = vmatmul.f32.gmra.mxu0 %v184
  %v396 = vpop.f32.mrf.mxu0
  %v397 = vadd.f32 0.0, %v396
  %398 = vmatmul.f32.gmra.mxu0 %v187
  %v399 = vpop.f32.mrf.mxu0
  %v400 = vadd.f32 0.0, %v399
  %401 = vmatmul.f32.gmra.mxu0 %v190
  %v402 = vpop.f32.mrf.mxu0
  %v403 = vadd.f32 0.0, %v402
  %404 = vmatmul.f32.gmra.mxu0 %v193
  %v405 = vpop.f32.mrf.mxu0
  %v406 = vadd.f32 0.0, %v405
  %407 = vmatmul.f32.gmra.mxu0 %v196
  %v408 = vpop.f32.mrf.mxu0
  %v409 = vadd.f32 0.0, %v408
  %410 = vmatmul.f32.gmra.mxu0 %v199
  %v411 = vpop.f32.mrf.mxu0
  %v412 = vadd.f32 0.0, %v411
  %413 = vmatmul.f32.gmra.mxu0 %v202
  %v414 = vpop.f32.mrf.mxu0
  %v415 = vadd.f32 0.0, %v414
  %416 = vmatmul.f32.gmra.mxu0 %v205
  %v417 = vpop.f32.mrf.mxu0
  %v418 = vadd.f32 0.0, %v417
  %419 = vmatmul.f32.gmra.mxu0 %v208
  %v420 = vpop.f32.mrf.mxu0
  %v421 = vadd.f32 0.0, %v420
  %422 = vmatmul.f32.gmra.mxu0 %v211
  %v423 = vpop.f32.mrf.mxu0
  %v424 = vadd.f32 0.0, %v423
  %425 = vmatmul.f32.gmra.mxu0 %v214
  %v426 = vpop.f32.mrf.mxu0
  %v427 = vadd.f32 0.0, %v426
  %428 = vmatmul.f32.gmra.mxu0 %v217
  %v429 = vpop.f32.mrf.mxu0
  %v430 = vadd.f32 0.0, %v429
  %431 = vmatmul.f32.gmra.mxu0 %v220
  %v432 = vpop.f32.mrf.mxu0
  %v433 = vadd.f32 0.0, %v432
  %434 = vmatmul.f32.gmra.mxu0 %v223
  %v435 = vpop.f32.mrf.mxu0
  %v436 = vadd.f32 0.0, %v435
  %437 = vmatmul.f32.gmra.mxu0 %v226
  %v438 = vpop.f32.mrf.mxu0
  %v439 = vadd.f32 0.0, %v438
  %440 = vmatmul.f32.gmra.mxu0 %v229
  %v441 = vpop.f32.mrf.mxu0
  %v442 = vadd.f32 0.0, %v441
  %443 = vmatmul.f32.gmra.mxu0 %v232
  %v444 = vpop.f32.mrf.mxu0
  %v445 = vadd.f32 0.0, %v444
  %446 = vmatmul.f32.gmra.mxu0 %v235
  %v447 = vpop.f32.mrf.mxu0
  %v448 = vadd.f32 0.0, %v447
  %449 = vmatmul.f32.gmra.mxu0 %v238
  %v450 = vpop.f32.mrf.mxu0
  %v451 = vadd.f32 0.0, %v450
  %452 = vmatmul.f32.gmra.mxu0 %v241
  %v453 = vpop.f32.mrf.mxu0
  %v454 = vadd.f32 0.0, %v453
  %455 = vmatmul.f32.gmra.mxu0 %v244
  %v456 = vpop.f32.mrf.mxu0
  %v457 = vadd.f32 0.0, %v456
  %458 = vmatmul.f32.gmra.mxu0 %v247
  %v459 = vpop.f32.mrf.mxu0
  %v460 = vadd.f32 0.0, %v459
  %461 = vmatmul.f32.gmra.mxu0 %v250
  %v462 = vpop.f32.mrf.mxu0
  %v463 = vadd.f32 0.0, %v462
  %464 = vmatmul.f32.gmra.mxu0 %v253
  %v465 = vpop.f32.mrf.mxu0
  %v466 = vadd.f32 0.0, %v465
  %467 = vmatmul.f32.gmra.mxu0 %v256
  %v468 = vpop.f32.mrf.mxu0
  %v469 = vadd.f32 0.0, %v468
  %470 = vmatmul.f32.gmra.mxu0 %v259
  %v471 = vpop.f32.mrf.mxu0
  %v472 = vadd.f32 0.0, %v471
  %473 = vmatmul.f32.gmra.mxu0 %v262
  %v474 = vpop.f32.mrf.mxu0
  %v475 = vadd.f32 0.0, %v474
  %476 = vmatmul.f32.gmra.mxu0 %v265
  %v477 = vpop.f32.mrf.mxu0
  %v478 = vadd.f32 0.0, %v477
  %479 = vmatmul.f32.gmra.mxu0 %v268
  %v480 = vpop.f32.mrf.mxu0
  %v481 = vadd.f32 0.0, %v480
  %482 = vmatmul.f32.gmra.mxu0 %v271
  %v483 = vpop.f32.mrf.mxu0
  %v484 = vadd.f32 0.0, %v483
  %485 = vdwg.mxu0
  %v486 = vmax.f32 %v295, 0.0
  %v487 = vmax.f32 %v298, 0.0
  %v488 = vmax.f32 %v301, 0.0
  %v489 = vmax.f32 %v304, 0.0
  %v490 = vmax.f32 %v307, 0.0
  %v491 = vmax.f32 %v310, 0.0
  %v492 = vmax.f32 %v313, 0.0
  %v493 = vmax.f32 %v316, 0.0
  %v494 = vmax.f32 %v319, 0.0
  %v495 = vmax.f32 %v322, 0.0
  %v496 = vmax.f32 %v325, 0.0
  %v497 = vmax.f32 %v328, 0.0
  %v498 = vmax.f32 %v331, 0.0
  %v499 = vmax.f32 %v334, 0.0
  %v500 = vmax.f32 %v337, 0.0
  %v501 = vmax.f32 %v340, 0.0
  %v502 = vmax.f32 %v343, 0.0
  %v503 = vmax.f32 %v346, 0.0
  %v504 = vmax.f32 %v349, 0.0
  %v505 = vmax.f32 %v352, 0.0
  %v506 = vmax.f32 %v355, 0.0
  %v507 = vmax.f32 %v358, 0.0
  %v508 = vmax.f32 %v361, 0.0
  %v509 = vmax.f32 %v364, 0.0
  %v510 = vmax.f32 %v367, 0.0
  %v511 = vmax.f32 %v370, 0.0
  %v512 = vmax.f32 %v373, 0.0
  %v513 = vmax.f32 %v376, 0.0
  %v514 = vmax.f32 %v379, 0.0
  %v515 = vmax.f32 %v382, 0.0
  %v516 = vmax.f32 %v385, 0.0
  %v517 = vmax.f32 %v388, 0.0
  %v518 = vmax.f32 %v391, 0.0
  %v519 = vmax.f32 %v394, 0.0
  %v520 = vmax.f32 %v397, 0.0
  %v521 = vmax.f32 %v400, 0.0
  %v522 = vmax.f32 %v403, 0.0
  %v523 = vmax.f32 %v406, 0.0
  %v524 = vmax.f32 %v409, 0.0
  %v525 = vmax.f32 %v412, 0.0
  %v526 = vmax.f32 %v415, 0.0
  %v527 = vmax.f32 %v418, 0.0
  %v528 = vmax.f32 %v421, 0.0
  %v529 = vmax.f32 %v424, 0.0
  %v530 = vmax.f32 %v427, 0.0
  %v531 = vmax.f32 %v430, 0.0
  %v532 = vmax.f32 %v433, 0.0
  %v533 = vmax.f32 %v436, 0.0
  %v534 = vmax.f32 %v439, 0.0
  %v535 = vmax.f32 %v442, 0.0
  %v536 = vmax.f32 %v445, 0.0
  %v537 = vmax.f32 %v448, 0.0
  %v538 = vmax.f32 %v451, 0.0
  %v539 = vmax.f32 %v454, 0.0
  %v540 = vmax.f32 %v457, 0.0
  %v541 = vmax.f32 %v460, 0.0
  %v542 = vmax.f32 %v463, 0.0
  %v543 = vmax.f32 %v466, 0.0
  %v544 = vmax.f32 %v469, 0.0
  %v545 = vmax.f32 %v472, 0.0
  %v546 = vmax.f32 %v475, 0.0
  %v547 = vmax.f32 %v478, 0.0
  %v548 = vmax.f32 %v481, 0.0
  %v549 = vmax.f32 %v484, 0.0
  %vm550 = vcmask 64512
  %551 = vst.msk [vmem:[%s2] sm:$0xff] %vm550, %v486
  %552 = vst.msk [vmem:[%s2 + $0x8] sm:$0xff] %vm550, %v487
  %553 = vst.msk [vmem:[%s2 + $0x10] sm:$0xff] %vm550, %v488
  %554 = vst.msk [vmem:[%s2 + $0x18] sm:$0xff] %vm550, %v489
  %555 = vst.msk [vmem:[%s2 + $0x20] sm:$0xff] %vm550, %v490
  %556 = vst.msk [vmem:[%s2 + $0x28] sm:$0xff] %vm550, %v491
  %557 = vst.msk [vmem:[%s2 + $0x30] sm:$0xff] %vm550, %v492
  %558 = vst.msk [vmem:[%s2 + $0x38] sm:$0xff] %vm550, %v493
  %559 = vst.msk [vmem:[%s2 + $0x40] sm:$0xff] %vm550, %v494
  %560 = vst.msk [vmem:[%s2 + $0x48] sm:$0xff] %vm550, %v495
  %561 = vst.msk [vmem:[%s2 + $0x50] sm:$0xff] %vm550, %v496
  %562 = vst.msk [vmem:[%s2 + $0x58] sm:$0xff] %vm550, %v497
  %563 = vst.msk [vmem:[%s2 + $0x60] sm:$0xff] %vm550, %v498
  %564 = vst.msk [vmem:[%s2 + $0x68] sm:$0xff] %vm550, %v499
  %565 = vst.msk [vmem:[%s2 + $0x70] sm:$0xff] %vm550, %v500
  %566 = vst.msk [vmem:[%s2 + $0x78] sm:$0xff] %vm550, %v501
  %567 = vst.msk [vmem:[%s2 + $0x80] sm:$0xff] %vm550, %v502
  %568 = vst.msk [vmem:[%s2 + $0x88] sm:$0xff] %vm550, %v503
  %569 = vst.msk [vmem:[%s2 + $0x90] sm:$0xff] %vm550, %v504
  %570 = vst.msk [vmem:[%s2 + $0x98] sm:$0xff] %vm550, %v505
  %571 = vst.msk [vmem:[%s2 + $0xa0] sm:$0xff] %vm550, %v506
  %572 = vst.msk [vmem:[%s2 + $0xa8] sm:$0xff] %vm550, %v507
  %573 = vst.msk [vmem:[%s2 + $0xb0] sm:$0xff] %vm550, %v508
  %574 = vst.msk [vmem:[%s2 + $0xb8] sm:$0xff] %vm550, %v509
  %575 = vst.msk [vmem:[%s2 + $0xc0] sm:$0xff] %vm550, %v510
  %576 = vst.msk [vmem:[%s2 + $0xc8] sm:$0xff] %vm550, %v511
  %577 = vst.msk [vmem:[%s2 + $0xd0] sm:$0xff] %vm550, %v512
  %578 = vst.msk [vmem:[%s2 + $0xd8] sm:$0xff] %vm550, %v513
  %579 = vst.msk [vmem:[%s2 + $0xe0] sm:$0xff] %vm550, %v514
  %580 = vst.msk [vmem:[%s2 + $0xe8] sm:$0xff] %vm550, %v515
  %581 = vst.msk [vmem:[%s2 + $0xf0] sm:$0xff] %vm550, %v516
  %582 = vst.msk [vmem:[%s2 + $0xf8] sm:$0xff] %vm550, %v517
  %583 = vst.msk [vmem:[%s2 + $0x100] sm:$0xff] %vm550, %v518
  %584 = vst.msk [vmem:[%s2 + $0x108] sm:$0xff] %vm550, %v519
  %585 = vst.msk [vmem:[%s2 + $0x110] sm:$0xff] %vm550, %v520
  %586 = vst.msk [vmem:[%s2 + $0x118] sm:$0xff] %vm550, %v521
  %587 = vst.msk [vmem:[%s2 + $0x120] sm:$0xff] %vm550, %v522
  %588 = vst.msk [vmem:[%s2 + $0x128] sm:$0xff] %vm550, %v523
  %589 = vst.msk [vmem:[%s2 + $0x130] sm:$0xff] %vm550, %v524
  %590 = vst.msk [vmem:[%s2 + $0x138] sm:$0xff] %vm550, %v525
  %591 = vst.msk [vmem:[%s2 + $0x140] sm:$0xff] %vm550, %v526
  %592 = vst.msk [vmem:[%s2 + $0x148] sm:$0xff] %vm550, %v527
  %593 = vst.msk [vmem:[%s2 + $0x150] sm:$0xff] %vm550, %v528
  %594 = vst.msk [vmem:[%s2 + $0x158] sm:$0xff] %vm550, %v529
  %595 = vst.msk [vmem:[%s2 + $0x160] sm:$0xff] %vm550, %v530
  %596 = vst.msk [vmem:[%s2 + $0x168] sm:$0xff] %vm550, %v531
  %597 = vst.msk [vmem:[%s2 + $0x170] sm:$0xff] %vm550, %v532
  %598 = vst.msk [vmem:[%s2 + $0x178] sm:$0xff] %vm550, %v533
  %599 = vst.msk [vmem:[%s2 + $0x180] sm:$0xff] %vm550, %v534
  %600 = vst.msk [vmem:[%s2 + $0x188] sm:$0xff] %vm550, %v535
  %601 = vst.msk [vmem:[%s2 + $0x190] sm:$0xff] %vm550, %v536
  %602 = vst.msk [vmem:[%s2 + $0x198] sm:$0xff] %vm550, %v537
  %603 = vst.msk [vmem:[%s2 + $0x1a0] sm:$0xff] %vm550, %v538
  %604 = vst.msk [vmem:[%s2 + $0x1a8] sm:$0xff] %vm550, %v539
  %605 = vst.msk [vmem:[%s2 + $0x1b0] sm:$0xff] %vm550, %v540
  %606 = vst.msk [vmem:[%s2 + $0x1b8] sm:$0xff] %vm550, %v541
  %607 = vst.msk [vmem:[%s2 + $0x1c0] sm:$0xff] %vm550, %v542
  %608 = vst.msk [vmem:[%s2 + $0x1c8] sm:$0xff] %vm550, %v543
  %609 = vst.msk [vmem:[%s2 + $0x1d0] sm:$0xff] %vm550, %v544
  %610 = vst.msk [vmem:[%s2 + $0x1d8] sm:$0xff] %vm550, %v545
  %611 = vst.msk [vmem:[%s2 + $0x1e0] sm:$0xff] %vm550, %v546
  %612 = vst.msk [vmem:[%s2 + $0x1e8] sm:$0xff] %vm550, %v547
  %613 = vst.msk [vmem:[%s2 + $0x1f0] sm:$0xff] %vm550, %v548
  %614 = vst.msk [vmem:[%s2 + $0x1f8] sm:$0xff] %vm550, %v549
  // Predicated region
  $region10: #{feature_extractor.1} parent=0 // pred_check
    _
  $region11: #{feature_extractor.1} parent=0 // pred_check_branch
    %616 = sbr.rel (0) target = $region13
  $region12: #{feature_extractor.1} parent=0 // pred_region
    _
  $region13: #{feature_extractor.1} parent=0 // pred_fallthru
    _
  // Predicated region
  $region14: #{feature_extractor.1} parent=0 // pred_check
    _
  $region15: #{feature_extractor.1} parent=0 // pred_check_branch
    %618 = sbr.rel (0) target = $region17
  $region16: #{feature_extractor.1} parent=0 // pred_region
    _
  $region17: #{feature_extractor.1} parent=0 // pred_fallthru
    _

</llo_original>
